<compile_context>
chip_gen: v7x
topology: tpu7x:2x2x1
jax: 0.10.0
libtpu: 0.0.40
codegen_flags: <defaults>
</compile_context>

<pallas_src>
import functools

import jax
import jax.numpy as jnp
from jax.experimental import pallas as pl
from jax.experimental.pallas import tpu as pltpu

SIGNAL_X_MAX, SIGNAL_X_MIN = 5.0, -5.0
SIGNAL_Y_MAX, SIGNAL_Y_MIN = 5.0, -5.0
SIGNAL_Z_MAX, SIGNAL_Z_MIN = 5.0, -5.0

# The 120 fixed feature indices used in the PyTorch forward (feat[[...]]).
FEAT_SELECT = (
    557, 581, 553, 551, 92, 554, 579, 570, 573, 577, 565, 286, 555, 549, 13,
    550, 63, 580, 556, 564, 0, 576, 567, 552, 578, 588, 597, 566, 571, 44,
    572, 574, 14, 582, 381, 594, 4, 593, 218, 25, 84, 592, 3, 591, 547, 561,
    562, 548, 319, 596, 558, 563, 87, 65, 599, 17, 88, 2, 49, 309, 6, 81, 15,
    590, 589, 43, 273, 420, 546, 568, 400, 277, 202, 287, 434, 435, 423, 431,
    301, 417, 412, 205, 179, 327, 176, 442, 172, 450, 391, 163, 154, 480, 485,
    490, 491, 498, 503, 507, 509, 452, 239, 388, 219, 303, 292, 310, 316, 320,
    322, 324, 326, 330, 336, 263, 262, 339, 340, 256, 345, 347)
N_FEAT = len(FEAT_SELECT)          # 120
F_PAD = 128                        # features padded to a full lane width
CB_ROWS = 128                      # stacked codebook rows (3*levels + timestamps, padded)

FEAT_VAL_LOW, FEAT_VAL_HIGH = 0.0, 1.0   # value range assumed for DensityFlocet levels

# 120 -> 128 padded selection (pad lanes re-select index 0; the corresponding
# key rows are zero, so padding never contributes).
FEAT_SELECT_PADDED = FEAT_SELECT + (FEAT_SELECT[0],) * (F_PAD - N_FEAT)


# ---------------------------------------------------------------------------
# Shared index math (used both in-kernel and in the pure-JAX reference)
# ---------------------------------------------------------------------------
def _round_half_even(v):
    """round-half-to-even (== torch.round / jnp.round), built only from
    floor / compare / select so it lowers cleanly on the TPU VPU."""
    f = jnp.floor(v)
    d = v - f
    up = f + 1.0
    r = jnp.where(d > 0.5, up, f)
    f_odd = (f - jnp.floor(f * 0.5) * 2.0) != 0.0
    return jnp.where(d == 0.5, jnp.where(f_odd, up, f), r)


def _value_to_index_f(x, low, high, n):
    """embeddings.Level index math (clamp + round); kept in f32 (exact small ints)."""
    x = jnp.clip(x, low, high)
    idx = _round_half_even((x - low) / (high - low) * (n - 1))
    return jnp.clip(idx, 0.0, float(n - 1))


# ---------------------------------------------------------------------------
# Pallas kernel — in-kernel one-hot gathers (MXU) + batched VPU math
# ---------------------------------------------------------------------------
def hdc_kernel(inp_ref, feat_ref, cb_ref, keys_ref, vals_ref, out_ref, *,
               levels, timestamps):
    # inp_ref : (1, W, 4)  per-sample raw signal window
    # feat_ref: (1, 1, 128) per-sample selected feature values (padded)
    # cb_ref  : (128, D)   stacked [lvl_x; lvl_y; lvl_z; time_cb; zeros]
    # keys_ref: (128, D)   DensityFlocet keys (rows >= 120 are zero)
    # vals_ref: (levels, D) DensityFlocet value-level codebook
    # out_ref : (1, 1, D)
    f32 = jnp.float32
    W = inp_ref.shape[1]
    D = cb_ref.shape[1]

    inp = inp_ref[0]                                                  # (W, 4)
    lane = jax.lax.broadcasted_iota(jnp.int32, (W, CB_ROWS), 1).astype(f32)

    # ---- sample_hv = multibind_w( (Lx[xw] + Ly[yw] + Lz[zw]) * T[tw] ) ----
    # Level indices (f32, exact small ints), offset into the stacked codebook.
    x_idx = _value_to_index_f(inp[:, 1:2], SIGNAL_X_MIN, SIGNAL_X_MAX, levels)
    y_idx = _value_to_index_f(inp[:, 2:3], SIGNAL_Y_MIN, SIGNAL_Y_MAX, levels) + levels
    z_idx = _value_to_index_f(inp[:, 3:4], SIGNAL_Z_MIN, SIGNAL_Z_MAX, levels) + 2 * levels
    # time_index[:W] == 0..W-1; Level(low=0, high=timestamps) as in the module.
    t_val = jax.lax.broadcasted_iota(jnp.int32, (W, CB_ROWS), 0).astype(f32)
    t_idx = _value_to_index_f(t_val, 0.0, float(timestamps), timestamps) + 3 * levels

    # One-hot rows: 3 ones per row (x, y, z blocks) / 1 one per row (t block).
    oh_xyz = ((lane == x_idx) | (lane == y_idx) | (lane == z_idx)).astype(f32)  # (W,128)
    oh_t = (lane == t_idx).astype(f32)                                          # (W,128)
    onehot = jnp.concatenate([oh_xyz, oh_t], axis=0)                            # (2W,128)

    # Single MXU matmul does all codebook gathers + the x+y+z sum at once.
    rows = jnp.dot(onehot, cb_ref[...], preferred_element_type=f32)             # (2W, D)
    hv = rows[:W] * rows[W:]                                                     # (W, D)

    # multibind == elementwise product over the window axis: log2 product tree.
    Wp = 1 if W == 1 else 1 << (W - 1).bit_length()
    if Wp > W:   # pad with multiplicative identity (trace-time only)
        hv = jnp.concatenate([hv, jnp.ones((Wp - W, D), f32)], axis=0)
    m = hv
    while m.shape[0] > 1:
        half = m.shape[0] // 2
        m = m[:half] * m[half:]
    sample_hv = m                                                                # (1, D)

    # ---- feat_hv = bundle_f( key_f * ValueLevel[idx_f] ), grouped by level ----
    # grouped_keys[l] = sum_{f: idx_f == l} keys[f]  via one-hot-transpose matmul,
    # then only a (levels, D) multiply + cross-sublane sum on the VPU/XLU.
    feat_vals = feat_ref[0]                                                      # (1, 128)
    f_idx = _value_to_index_f(feat_vals, FEAT_VAL_LOW, FEAT_VAL_HIGH, levels)    # (1, 128)
    lvl = jax.lax.broadcasted_iota(jnp.int32, (levels, F_PAD), 0).astype(f32)
    oh_feat = (lvl == f_idx).astype(f32)                                         # (levels,128)
    grouped_keys = jnp.dot(oh_feat, keys_ref[...], preferred_element_type=f32)   # (levels, D)
    feat_hv = jnp.sum(grouped_keys * vals_ref[...], axis=0, keepdims=True)       # (1, D)

    # ---- combine + hard_quantize (torchhd: where(x > 0, 1, -1)) ----
    combined = sample_hv + feat_hv + sample_hv * feat_hv
    out_ref[0] = jnp.where(combined > 0, 1.0, -1.0).astype(out_ref.dtype)


# ---------------------------------------------------------------------------
# Parameter construction (deterministic, torchhd-Level-style codebooks)
# ---------------------------------------------------------------------------
def make_level_codebook(key, n, d):
    """Level hypervectors: vector i flips progressively more bits of a base HV."""
    k1, k2 = jax.random.split(key)
    base = jnp.where(jax.random.bernoulli(k1, 0.5, (d,)), 1.0, -1.0).astype(jnp.float32)
    thresh = jax.random.uniform(k2, (d,), dtype=jnp.float32)
    frac = jnp.arange(n, dtype=jnp.float32)[:, None] / max(n - 1, 1)
    flip = thresh[None, :] < frac
    return jnp.where(flip, -base[None, :], base[None, :])


def make_bipolar(key, n, d):
    return jnp.where(jax.random.bernoulli(key, 0.5, (n, d)), 1.0, -1.0).astype(jnp.float32)


def init_params(key, levels, timestamps, out_dimension):
    assert 3 * levels + timestamps <= CB_ROWS, "stacked codebook must fit 128 rows"
    assert levels <= F_PAD
    ks = jax.random.split(key, 6)
    lvl_x = make_level_codebook(ks[0], levels, out_dimension)
    lvl_y = make_level_codebook(ks[1], levels, out_dimension)
    lvl_z = make_level_codebook(ks[2], levels, out_dimension)
    time_cb = make_level_codebook(ks[3], timestamps, out_dimension)
    keys = make_bipolar(ks[4], N_FEAT, out_dimension)
    val_cb = make_level_codebook(ks[5], levels, out_dimension)

    # Stacked codebook: rows [0,16)=lvl_x, [16,32)=lvl_y, [32,48)=lvl_z,
    # [48,48+T)=time_cb, remaining rows zero (never selected by the one-hots).
    stacked = jnp.zeros((CB_ROWS, out_dimension), jnp.float32)
    stacked = stacked.at[0:levels].set(lvl_x)
    stacked = stacked.at[levels:2 * levels].set(lvl_y)
    stacked = stacked.at[2 * levels:3 * levels].set(lvl_z)
    stacked = stacked.at[3 * levels:3 * levels + timestamps].set(time_cb)

    keys_pad = jnp.zeros((F_PAD, out_dimension), jnp.float32).at[:N_FEAT].set(keys)

    return {
        "stacked_cb": stacked, "keys": keys_pad, "val_cb": val_cb,
        # raw codebooks kept only for the pure-JAX reference
        "lvl_x": lvl_x, "lvl_y": lvl_y, "lvl_z": lvl_z,
        "time_cb": time_cb, "keys_raw": keys,
    }


# ---------------------------------------------------------------------------
# Wrapper: tiny static feat selection + one batched pallas_call
# ---------------------------------------------------------------------------
def hdc_level_encode(params, inp, feat, levels, timestamps):
    """inp: (W, 4) or (B, W, 4); feat: (600,) or (B, 600)."""
    single = inp.ndim == 2
    if single:
        inp, feat = inp[None], feat[None]
    inp = inp.astype(jnp.float32)
    feat = feat.astype(jnp.float32)
    B, W, C = inp.shape
    D = params["stacked_cb"].shape[1]
    assert C >= 4, "forward uses input[:, 1..3]"
    assert W <= 15, "float32 sample_hv exactness requires window <= 15 (3^W < 2^24)"

    # Static 120-element selection (padded to 128 lanes; pad lanes hit zero
    # key rows in the kernel).  This is the only D-independent wrapper op.
    sel = jnp.asarray(FEAT_SELECT_PADDED, dtype=jnp.int32)
    feat_sel = feat[:, sel].reshape(B, 1, F_PAD)

    kern = functools.partial(hdc_kernel, levels=levels, timestamps=timestamps)
    out = pl.pallas_call(
        kern,
        out_shape=jax.ShapeDtypeStruct((B, 1, D), jnp.float32),
        grid_spec=pltpu.PrefetchScalarGridSpec(
            num_scalar_prefetch=0,
            grid=(B,),
            in_specs=[
                # per-sample tiles (tiny):
                pl.BlockSpec((1, W, C), lambda b: (b, 0, 0)),
                pl.BlockSpec((1, 1, F_PAD), lambda b: (b, 0, 0)),
                # codebooks: constant index_map -> resident in VMEM across grid.
                # (If D is scaled to typical HDC sizes, add a second grid axis
                #  tiling D in multiples of 128 lanes for v7x's 64 MiB VMEM.)
                pl.BlockSpec((CB_ROWS, D), lambda b: (0, 0)),
                pl.BlockSpec((F_PAD, D), lambda b: (0, 0)),
                pl.BlockSpec((levels, D), lambda b: (0, 0)),
            ],
            out_specs=pl.BlockSpec((1, 1, D), lambda b: (b, 0, 0)),
        ),
        compiler_params=pltpu.CompilerParams(dimension_semantics=("parallel",)),
    )(inp, feat_sel, params["stacked_cb"], params["keys"], params["val_cb"])

    out = out.reshape(B, D)
    return out.reshape(-1) if single else out   # module returns .flatten()


# ---------------------------------------------------------------------------
# Pure-JAX reference (same math, no Pallas) for a correctness check
# ---------------------------------------------------------------------------
def reference(params, inp, feat, levels, timestamps):
    inp = inp.astype(jnp.float32)
    feat = feat.astype(jnp.float32)
    W = inp.shape[0]

    def v2i(x, low, high, n):
        return _value_to_index_f(x, low, high, n).astype(jnp.int32)

    x_lv = params["lvl_x"][v2i(inp[:, 1], SIGNAL_X_MIN, SIGNAL_X_MAX, levels)]
    y_lv = params["lvl_y"][v2i(inp[:, 2], SIGNAL_Y_MIN, SIGNAL_Y_MAX, levels)]
    z_lv = params["lvl_z"][v2i(inp[:, 3], SIGNAL_Z_MIN, SIGNAL_Z_MAX, levels)]
    t_idx = v2i(jnp.arange(W, dtype=jnp.float32), 0.0, float(timestamps), timestamps)
    times = params["time_cb"][t_idx]
    sample_hv = jnp.prod((x_lv + y_lv + z_lv) * times, axis=0)               # multibind
    feat_sel = feat[jnp.asarray(FEAT_SELECT, dtype=jnp.int32)]
    v_idx = v2i(feat_sel, FEAT_VAL_LOW, FEAT_VAL_HIGH, levels)
    feat_hv = jnp.sum(params["keys_raw"] * params["val_cb"][v_idx], axis=0)  # bundle
    combined = sample_hv + feat_hv + sample_hv * feat_hv
    return jnp.where(combined > 0, 1.0, -1.0)


# ---------------------------------------------------------------------------
if __name__ == "__main__":
    LEVELS = 16
    TIMESTAMPS = 8          # window size (input.size(0)) equals timestamps here
    OUT_DIM = 256
    WINDOW = 8
    FEAT_LEN = 600          # indices in FEAT_SELECT go up to 599
    BATCH = 2

    key = jax.random.PRNGKey(0)
    k_params, k_inp, k_feat = jax.random.split(key, 3)

    params = init_params(k_params, LEVELS, TIMESTAMPS, OUT_DIM)
    inp = jax.random.normal(k_inp, (BATCH, WINDOW, 4), dtype=jnp.float32) * 3.0
    feat = jax.random.uniform(k_feat, (BATCH, FEAT_LEN), dtype=jnp.float32)

    # Batched path (grid over samples).
    out = jax.block_until_ready(hdc_level_encode(params, inp, feat, LEVELS, TIMESTAMPS))
    assert out.shape == (BATCH, OUT_DIM)
    for b in range(BATCH):
        ref = jax.block_until_ready(reference(params, inp[b], feat[b], LEVELS, TIMESTAMPS))
        assert bool(jnp.all(out[b] == ref)), f"Pallas kernel mismatch vs reference (sample {b})"

    # Single-sample path (exact module signature: (window, channels), flat output).
    out1 = jax.block_until_ready(hdc_level_encode(params, inp[0], feat[0], LEVELS, TIMESTAMPS))
    assert out1.shape == (OUT_DIM,)
    assert bool(jnp.all(out1 == out[0]))

    print("KERNEL_OK")
</pallas_src>

<mosaic_0001>
module attributes {stable_mosaic.version = 11 : i64} {
  func.func @hdc_kernel(%arg0: i32, %arg1: memref<1x8x4xf32, #tpu.memory_space<vmem>>, %arg2: memref<1x1x128xf32, #tpu.memory_space<vmem>>, %arg3: memref<128x256xf32, #tpu.memory_space<vmem>>, %arg4: memref<128x256xf32, #tpu.memory_space<vmem>>, %arg5: memref<16x256xf32, #tpu.memory_space<vmem>>, %arg6: memref<1x1x256xf32, #tpu.memory_space<vmem>>) attributes {dimension_semantics = [#tpu.dimension_semantics<parallel>], iteration_bounds = array<i64: 2>, scalar_prefetch = 0 : i64, scratch_operands = 0 : i64, tpu.core_type = #tpu.core_type<tc>, window_params = [{transform_indices = @transform_0, window_bounds = array<i64: 1, 8, 4>}, {transform_indices = @transform_1, window_bounds = array<i64: 1, 1, 128>}, {pipeline_mode = #tpu.pipeline_mode<synchronous>, transform_indices = @transform_2, window_bounds = array<i64: 128, 256>}, {pipeline_mode = #tpu.pipeline_mode<synchronous>, transform_indices = @transform_3, window_bounds = array<i64: 128, 256>}, {pipeline_mode = #tpu.pipeline_mode<synchronous>, transform_indices = @transform_4, window_bounds = array<i64: 16, 256>}, {transform_indices = @transform_5, window_bounds = array<i64: 1, 1, 256>}]} {
    %c0 = arith.constant 0 : index
    %c0_0 = arith.constant 0 : index
    %c0_1 = arith.constant 0 : index
    %0 = vector.load %arg1[%c0, %c0_0, %c0_1] : memref<1x8x4xf32, #tpu.memory_space<vmem>>, vector<1x8x4xf32>
    %1 = vector.shape_cast %0 : vector<1x8x4xf32> to vector<8x4xf32>
    %2 = tpu.iota {dimensions = array<i32: 1>} : vector<8x128xi32>
    %3 = arith.sitofp %2 : vector<8x128xi32> to vector<8x128xf32>
    %4 = vector.extract_strided_slice %1 {offsets = [0, 1], sizes = [8, 1], strides = [1, 1]} : vector<8x4xf32> to vector<8x1xf32>
    %cst = arith.constant -5.000000e+00 : f32
    %cst_2 = arith.constant 5.000000e+00 : f32
    %5 = vector.broadcast %cst : f32 to vector<8x1xf32>
    %6 = arith.maximumf %5, %4 : vector<8x1xf32>
    %7 = vector.broadcast %cst_2 : f32 to vector<8x1xf32>
    %8 = arith.minimumf %7, %6 : vector<8x1xf32>
    %cst_3 = arith.constant -5.000000e+00 : f32
    %9 = vector.broadcast %cst_3 : f32 to vector<8x1xf32>
    %10 = arith.subf %8, %9 : vector<8x1xf32>
    %cst_4 = arith.constant 1.000000e+01 : f32
    %11 = vector.broadcast %cst_4 : f32 to vector<8x1xf32>
    %12 = arith.divf %10, %11 : vector<8x1xf32>
    %cst_5 = arith.constant 1.500000e+01 : f32
    %13 = vector.broadcast %cst_5 : f32 to vector<8x1xf32>
    %14 = arith.mulf %12, %13 : vector<8x1xf32>
    %15 = math.floor %14 : vector<8x1xf32>
    %16 = arith.subf %14, %15 : vector<8x1xf32>
    %cst_6 = arith.constant 1.000000e+00 : f32
    %17 = vector.broadcast %cst_6 : f32 to vector<8x1xf32>
    %18 = arith.addf %15, %17 : vector<8x1xf32>
    %cst_7 = arith.constant 5.000000e-01 : f32
    %19 = vector.broadcast %cst_7 : f32 to vector<8x1xf32>
    %20 = arith.cmpf ogt, %16, %19 : vector<8x1xf32>
    %21 = arith.select %20, %18, %15 : vector<8x1xi1>, vector<8x1xf32>
    %cst_8 = arith.constant 5.000000e-01 : f32
    %22 = vector.broadcast %cst_8 : f32 to vector<8x1xf32>
    %23 = arith.mulf %15, %22 : vector<8x1xf32>
    %24 = math.floor %23 : vector<8x1xf32>
    %cst_9 = arith.constant 2.000000e+00 : f32
    %25 = vector.broadcast %cst_9 : f32 to vector<8x1xf32>
    %26 = arith.mulf %24, %25 : vector<8x1xf32>
    %27 = arith.subf %15, %26 : vector<8x1xf32>
    %cst_10 = arith.constant 0.000000e+00 : f32
    %28 = vector.broadcast %cst_10 : f32 to vector<8x1xf32>
    %29 = arith.cmpf one, %27, %28 : vector<8x1xf32>
    %cst_11 = arith.constant 5.000000e-01 : f32
    %30 = vector.broadcast %cst_11 : f32 to vector<8x1xf32>
    %31 = arith.cmpf oeq, %16, %30 : vector<8x1xf32>
    %32 = arith.select %29, %18, %15 : vector<8x1xi1>, vector<8x1xf32>
    %33 = arith.select %31, %32, %21 : vector<8x1xi1>, vector<8x1xf32>
    %cst_12 = arith.constant 0.000000e+00 : f32
    %cst_13 = arith.constant 1.500000e+01 : f32
    %34 = vector.broadcast %cst_12 : f32 to vector<8x1xf32>
    %35 = arith.maximumf %34, %33 : vector<8x1xf32>
    %36 = vector.broadcast %cst_13 : f32 to vector<8x1xf32>
    %37 = arith.minimumf %36, %35 : vector<8x1xf32>
    %38 = vector.extract_strided_slice %1 {offsets = [0, 2], sizes = [8, 1], strides = [1, 1]} : vector<8x4xf32> to vector<8x1xf32>
    %cst_14 = arith.constant -5.000000e+00 : f32
    %cst_15 = arith.constant 5.000000e+00 : f32
    %39 = vector.broadcast %cst_14 : f32 to vector<8x1xf32>
    %40 = arith.maximumf %39, %38 : vector<8x1xf32>
    %41 = vector.broadcast %cst_15 : f32 to vector<8x1xf32>
    %42 = arith.minimumf %41, %40 : vector<8x1xf32>
    %cst_16 = arith.constant -5.000000e+00 : f32
    %43 = vector.broadcast %cst_16 : f32 to vector<8x1xf32>
    %44 = arith.subf %42, %43 : vector<8x1xf32>
    %cst_17 = arith.constant 1.000000e+01 : f32
    %45 = vector.broadcast %cst_17 : f32 to vector<8x1xf32>
    %46 = arith.divf %44, %45 : vector<8x1xf32>
    %cst_18 = arith.constant 1.500000e+01 : f32
    %47 = vector.broadcast %cst_18 : f32 to vector<8x1xf32>
    %48 = arith.mulf %46, %47 : vector<8x1xf32>
    %49 = math.floor %48 : vector<8x1xf32>
    %50 = arith.subf %48, %49 : vector<8x1xf32>
    %cst_19 = arith.constant 1.000000e+00 : f32
    %51 = vector.broadcast %cst_19 : f32 to vector<8x1xf32>
    %52 = arith.addf %49, %51 : vector<8x1xf32>
    %cst_20 = arith.constant 5.000000e-01 : f32
    %53 = vector.broadcast %cst_20 : f32 to vector<8x1xf32>
    %54 = arith.cmpf ogt, %50, %53 : vector<8x1xf32>
    %55 = arith.select %54, %52, %49 : vector<8x1xi1>, vector<8x1xf32>
    %cst_21 = arith.constant 5.000000e-01 : f32
    %56 = vector.broadcast %cst_21 : f32 to vector<8x1xf32>
    %57 = arith.mulf %49, %56 : vector<8x1xf32>
    %58 = math.floor %57 : vector<8x1xf32>
    %cst_22 = arith.constant 2.000000e+00 : f32
    %59 = vector.broadcast %cst_22 : f32 to vector<8x1xf32>
    %60 = arith.mulf %58, %59 : vector<8x1xf32>
    %61 = arith.subf %49, %60 : vector<8x1xf32>
    %cst_23 = arith.constant 0.000000e+00 : f32
    %62 = vector.broadcast %cst_23 : f32 to vector<8x1xf32>
    %63 = arith.cmpf one, %61, %62 : vector<8x1xf32>
    %cst_24 = arith.constant 5.000000e-01 : f32
    %64 = vector.broadcast %cst_24 : f32 to vector<8x1xf32>
    %65 = arith.cmpf oeq, %50, %64 : vector<8x1xf32>
    %66 = arith.select %63, %52, %49 : vector<8x1xi1>, vector<8x1xf32>
    %67 = arith.select %65, %66, %55 : vector<8x1xi1>, vector<8x1xf32>
    %cst_25 = arith.constant 0.000000e+00 : f32
    %cst_26 = arith.constant 1.500000e+01 : f32
    %68 = vector.broadcast %cst_25 : f32 to vector<8x1xf32>
    %69 = arith.maximumf %68, %67 : vector<8x1xf32>
    %70 = vector.broadcast %cst_26 : f32 to vector<8x1xf32>
    %71 = arith.minimumf %70, %69 : vector<8x1xf32>
    %cst_27 = arith.constant 1.600000e+01 : f32
    %72 = vector.broadcast %cst_27 : f32 to vector<8x1xf32>
    %73 = arith.addf %71, %72 : vector<8x1xf32>
    %74 = vector.extract_strided_slice %1 {offsets = [0, 3], sizes = [8, 1], strides = [1, 1]} : vector<8x4xf32> to vector<8x1xf32>
    %cst_28 = arith.constant -5.000000e+00 : f32
    %cst_29 = arith.constant 5.000000e+00 : f32
    %75 = vector.broadcast %cst_28 : f32 to vector<8x1xf32>
    %76 = arith.maximumf %75, %74 : vector<8x1xf32>
    %77 = vector.broadcast %cst_29 : f32 to vector<8x1xf32>
    %78 = arith.minimumf %77, %76 : vector<8x1xf32>
    %cst_30 = arith.constant -5.000000e+00 : f32
    %79 = vector.broadcast %cst_30 : f32 to vector<8x1xf32>
    %80 = arith.subf %78, %79 : vector<8x1xf32>
    %cst_31 = arith.constant 1.000000e+01 : f32
    %81 = vector.broadcast %cst_31 : f32 to vector<8x1xf32>
    %82 = arith.divf %80, %81 : vector<8x1xf32>
    %cst_32 = arith.constant 1.500000e+01 : f32
    %83 = vector.broadcast %cst_32 : f32 to vector<8x1xf32>
    %84 = arith.mulf %82, %83 : vector<8x1xf32>
    %85 = math.floor %84 : vector<8x1xf32>
    %86 = arith.subf %84, %85 : vector<8x1xf32>
    %cst_33 = arith.constant 1.000000e+00 : f32
    %87 = vector.broadcast %cst_33 : f32 to vector<8x1xf32>
    %88 = arith.addf %85, %87 : vector<8x1xf32>
    %cst_34 = arith.constant 5.000000e-01 : f32
    %89 = vector.broadcast %cst_34 : f32 to vector<8x1xf32>
    %90 = arith.cmpf ogt, %86, %89 : vector<8x1xf32>
    %91 = arith.select %90, %88, %85 : vector<8x1xi1>, vector<8x1xf32>
    %cst_35 = arith.constant 5.000000e-01 : f32
    %92 = vector.broadcast %cst_35 : f32 to vector<8x1xf32>
    %93 = arith.mulf %85, %92 : vector<8x1xf32>
    %94 = math.floor %93 : vector<8x1xf32>
    %cst_36 = arith.constant 2.000000e+00 : f32
    %95 = vector.broadcast %cst_36 : f32 to vector<8x1xf32>
    %96 = arith.mulf %94, %95 : vector<8x1xf32>
    %97 = arith.subf %85, %96 : vector<8x1xf32>
    %cst_37 = arith.constant 0.000000e+00 : f32
    %98 = vector.broadcast %cst_37 : f32 to vector<8x1xf32>
    %99 = arith.cmpf one, %97, %98 : vector<8x1xf32>
    %cst_38 = arith.constant 5.000000e-01 : f32
    %100 = vector.broadcast %cst_38 : f32 to vector<8x1xf32>
    %101 = arith.cmpf oeq, %86, %100 : vector<8x1xf32>
    %102 = arith.select %99, %88, %85 : vector<8x1xi1>, vector<8x1xf32>
    %103 = arith.select %101, %102, %91 : vector<8x1xi1>, vector<8x1xf32>
    %cst_39 = arith.constant 0.000000e+00 : f32
    %cst_40 = arith.constant 1.500000e+01 : f32
    %104 = vector.broadcast %cst_39 : f32 to vector<8x1xf32>
    %105 = arith.maximumf %104, %103 : vector<8x1xf32>
    %106 = vector.broadcast %cst_40 : f32 to vector<8x1xf32>
    %107 = arith.minimumf %106, %105 : vector<8x1xf32>
    %cst_41 = arith.constant 3.200000e+01 : f32
    %108 = vector.broadcast %cst_41 : f32 to vector<8x1xf32>
    %109 = arith.addf %107, %108 : vector<8x1xf32>
    %110 = tpu.iota {dimensions = array<i32: 0>} : vector<8x128xi32>
    %111 = arith.sitofp %110 : vector<8x128xi32> to vector<8x128xf32>
    %cst_42 = arith.constant 0.000000e+00 : f32
    %cst_43 = arith.constant 8.000000e+00 : f32
    %112 = vector.broadcast %cst_42 : f32 to vector<8x128xf32>
    %113 = arith.maximumf %112, %111 : vector<8x128xf32>
    %114 = vector.broadcast %cst_43 : f32 to vector<8x128xf32>
    %115 = arith.minimumf %114, %113 : vector<8x128xf32>
    %cst_44 = arith.constant 0.000000e+00 : f32
    %116 = vector.broadcast %cst_44 : f32 to vector<8x128xf32>
    %117 = arith.subf %115, %116 : vector<8x128xf32>
    %cst_45 = arith.constant 8.000000e+00 : f32
    %118 = vector.broadcast %cst_45 : f32 to vector<8x128xf32>
    %119 = arith.divf %117, %118 : vector<8x128xf32>
    %cst_46 = arith.constant 7.000000e+00 : f32
    %120 = vector.broadcast %cst_46 : f32 to vector<8x128xf32>
    %121 = arith.mulf %119, %120 : vector<8x128xf32>
    %122 = math.floor %121 : vector<8x128xf32>
    %123 = arith.subf %121, %122 : vector<8x128xf32>
    %cst_47 = arith.constant 1.000000e+00 : f32
    %124 = vector.broadcast %cst_47 : f32 to vector<8x128xf32>
    %125 = arith.addf %122, %124 : vector<8x128xf32>
    %cst_48 = arith.constant 5.000000e-01 : f32
    %126 = vector.broadcast %cst_48 : f32 to vector<8x128xf32>
    %127 = arith.cmpf ogt, %123, %126 : vector<8x128xf32>
    %128 = arith.select %127, %125, %122 : vector<8x128xi1>, vector<8x128xf32>
    %cst_49 = arith.constant 5.000000e-01 : f32
    %129 = vector.broadcast %cst_49 : f32 to vector<8x128xf32>
    %130 = arith.mulf %122, %129 : vector<8x128xf32>
    %131 = math.floor %130 : vector<8x128xf32>
    %cst_50 = arith.constant 2.000000e+00 : f32
    %132 = vector.broadcast %cst_50 : f32 to vector<8x128xf32>
    %133 = arith.mulf %131, %132 : vector<8x128xf32>
    %134 = arith.subf %122, %133 : vector<8x128xf32>
    %cst_51 = arith.constant 0.000000e+00 : f32
    %135 = vector.broadcast %cst_51 : f32 to vector<8x128xf32>
    %136 = arith.cmpf one, %134, %135 : vector<8x128xf32>
    %cst_52 = arith.constant 5.000000e-01 : f32
    %137 = vector.broadcast %cst_52 : f32 to vector<8x128xf32>
    %138 = arith.cmpf oeq, %123, %137 : vector<8x128xf32>
    %139 = arith.select %136, %125, %122 : vector<8x128xi1>, vector<8x128xf32>
    %140 = arith.select %138, %139, %128 : vector<8x128xi1>, vector<8x128xf32>
    %cst_53 = arith.constant 0.000000e+00 : f32
    %cst_54 = arith.constant 7.000000e+00 : f32
    %141 = vector.broadcast %cst_53 : f32 to vector<8x128xf32>
    %142 = arith.maximumf %141, %140 : vector<8x128xf32>
    %143 = vector.broadcast %cst_54 : f32 to vector<8x128xf32>
    %144 = arith.minimumf %143, %142 : vector<8x128xf32>
    %cst_55 = arith.constant 4.800000e+01 : f32
    %145 = vector.broadcast %cst_55 : f32 to vector<8x128xf32>
    %146 = arith.addf %144, %145 : vector<8x128xf32>
    %147 = vector.broadcast %37 : vector<8x1xf32> to vector<8x128xf32>
    %148 = arith.cmpf oeq, %3, %147 : vector<8x128xf32>
    %149 = vector.broadcast %73 : vector<8x1xf32> to vector<8x128xf32>
    %150 = arith.cmpf oeq, %3, %149 : vector<8x128xf32>
    %151 = arith.ori %148, %150 : vector<8x128xi1>
    %152 = vector.broadcast %109 : vector<8x1xf32> to vector<8x128xf32>
    %153 = arith.cmpf oeq, %3, %152 : vector<8x128xf32>
    %154 = arith.ori %151, %153 : vector<8x128xi1>
    %155 = arith.extui %154 : vector<8x128xi1> to vector<8x128xi32>
    %156 = arith.sitofp %155 : vector<8x128xi32> to vector<8x128xf32>
    %157 = arith.cmpf oeq, %3, %146 : vector<8x128xf32>
    %158 = arith.extui %157 : vector<8x128xi1> to vector<8x128xi32>
    %159 = arith.sitofp %158 : vector<8x128xi32> to vector<8x128xf32>
    %160 = tpu.concatenate %156, %159 in 0 : vector<8x128xf32>, vector<8x128xf32> -> vector<16x128xf32>
    %c0_56 = arith.constant 0 : index
    %c0_57 = arith.constant 0 : index
    %161 = vector.load %arg3[%c0_56, %c0_57] : memref<128x256xf32, #tpu.memory_space<vmem>>, vector<128x256xf32>
    %cst_58 = arith.constant dense<0.000000e+00> : vector<16x256xf32>
    %162 = tpu.matmul %160, %161, %cst_58 {dimension_numbers = #tpu.dot_dimension_numbers<[1], [0], [0], [1], [0, 0, 1, 1], [], []>} : vector<16x128xf32>, vector<128x256xf32>, vector<16x256xf32> -> vector<16x256xf32>
    %163 = vector.extract_strided_slice %162 {offsets = [0, 0], sizes = [8, 256], strides = [1, 1]} : vector<16x256xf32> to vector<8x256xf32>
    %164 = vector.extract_strided_slice %162 {offsets = [8, 0], sizes = [8, 256], strides = [1, 1]} : vector<16x256xf32> to vector<8x256xf32>
    %165 = arith.mulf %163, %164 : vector<8x256xf32>
    %166 = vector.extract_strided_slice %165 {offsets = [0, 0], sizes = [4, 256], strides = [1, 1]} : vector<8x256xf32> to vector<4x256xf32>
    %167 = vector.extract_strided_slice %165 {offsets = [4, 0], sizes = [4, 256], strides = [1, 1]} : vector<8x256xf32> to vector<4x256xf32>
    %168 = arith.mulf %166, %167 : vector<4x256xf32>
    %169 = vector.extract_strided_slice %168 {offsets = [0, 0], sizes = [2, 256], strides = [1, 1]} : vector<4x256xf32> to vector<2x256xf32>
    %170 = vector.extract_strided_slice %168 {offsets = [2, 0], sizes = [2, 256], strides = [1, 1]} : vector<4x256xf32> to vector<2x256xf32>
    %171 = arith.mulf %169, %170 : vector<2x256xf32>
    %172 = vector.extract_strided_slice %171 {offsets = [0, 0], sizes = [1, 256], strides = [1, 1]} : vector<2x256xf32> to vector<1x256xf32>
    %173 = vector.extract_strided_slice %171 {offsets = [1, 0], sizes = [1, 256], strides = [1, 1]} : vector<2x256xf32> to vector<1x256xf32>
    %174 = arith.mulf %172, %173 : vector<1x256xf32>
    %c0_59 = arith.constant 0 : index
    %c0_60 = arith.constant 0 : index
    %c0_61 = arith.constant 0 : index
    %175 = vector.load %arg2[%c0_59, %c0_60, %c0_61] : memref<1x1x128xf32, #tpu.memory_space<vmem>>, vector<1x1x128xf32>
    %176 = vector.shape_cast %175 : vector<1x1x128xf32> to vector<1x128xf32>
    %cst_62 = arith.constant 0.000000e+00 : f32
    %cst_63 = arith.constant 1.000000e+00 : f32
    %177 = vector.broadcast %cst_62 : f32 to vector<1x128xf32>
    %178 = arith.maximumf %177, %176 : vector<1x128xf32>
    %179 = vector.broadcast %cst_63 : f32 to vector<1x128xf32>
    %180 = arith.minimumf %179, %178 : vector<1x128xf32>
    %cst_64 = arith.constant 0.000000e+00 : f32
    %181 = vector.broadcast %cst_64 : f32 to vector<1x128xf32>
    %182 = arith.subf %180, %181 : vector<1x128xf32>
    %cst_65 = arith.constant 1.000000e+00 : f32
    %183 = vector.broadcast %cst_65 : f32 to vector<1x128xf32>
    %184 = arith.divf %182, %183 : vector<1x128xf32>
    %cst_66 = arith.constant 1.500000e+01 : f32
    %185 = vector.broadcast %cst_66 : f32 to vector<1x128xf32>
    %186 = arith.mulf %184, %185 : vector<1x128xf32>
    %187 = math.floor %186 : vector<1x128xf32>
    %188 = arith.subf %186, %187 : vector<1x128xf32>
    %cst_67 = arith.constant 1.000000e+00 : f32
    %189 = vector.broadcast %cst_67 : f32 to vector<1x128xf32>
    %190 = arith.addf %187, %189 : vector<1x128xf32>
    %cst_68 = arith.constant 5.000000e-01 : f32
    %191 = vector.broadcast %cst_68 : f32 to vector<1x128xf32>
    %192 = arith.cmpf ogt, %188, %191 : vector<1x128xf32>
    %193 = arith.select %192, %190, %187 : vector<1x128xi1>, vector<1x128xf32>
    %cst_69 = arith.constant 5.000000e-01 : f32
    %194 = vector.broadcast %cst_69 : f32 to vector<1x128xf32>
    %195 = arith.mulf %187, %194 : vector<1x128xf32>
    %196 = math.floor %195 : vector<1x128xf32>
    %cst_70 = arith.constant 2.000000e+00 : f32
    %197 = vector.broadcast %cst_70 : f32 to vector<1x128xf32>
    %198 = arith.mulf %196, %197 : vector<1x128xf32>
    %199 = arith.subf %187, %198 : vector<1x128xf32>
    %cst_71 = arith.constant 0.000000e+00 : f32
    %200 = vector.broadcast %cst_71 : f32 to vector<1x128xf32>
    %201 = arith.cmpf one, %199, %200 : vector<1x128xf32>
    %cst_72 = arith.constant 5.000000e-01 : f32
    %202 = vector.broadcast %cst_72 : f32 to vector<1x128xf32>
    %203 = arith.cmpf oeq, %188, %202 : vector<1x128xf32>
    %204 = arith.select %201, %190, %187 : vector<1x128xi1>, vector<1x128xf32>
    %205 = arith.select %203, %204, %193 : vector<1x128xi1>, vector<1x128xf32>
    %cst_73 = arith.constant 0.000000e+00 : f32
    %cst_74 = arith.constant 1.500000e+01 : f32
    %206 = vector.broadcast %cst_73 : f32 to vector<1x128xf32>
    %207 = arith.maximumf %206, %205 : vector<1x128xf32>
    %208 = vector.broadcast %cst_74 : f32 to vector<1x128xf32>
    %209 = arith.minimumf %208, %207 : vector<1x128xf32>
    %210 = tpu.iota {dimensions = array<i32: 0>} : vector<16x128xi32>
    %211 = arith.sitofp %210 : vector<16x128xi32> to vector<16x128xf32>
    %212 = vector.broadcast %209 : vector<1x128xf32> to vector<16x128xf32>
    %213 = arith.cmpf oeq, %211, %212 : vector<16x128xf32>
    %214 = arith.extui %213 : vector<16x128xi1> to vector<16x128xi32>
    %215 = arith.sitofp %214 : vector<16x128xi32> to vector<16x128xf32>
    %c0_75 = arith.constant 0 : index
    %c0_76 = arith.constant 0 : index
    %216 = vector.load %arg4[%c0_75, %c0_76] : memref<128x256xf32, #tpu.memory_space<vmem>>, vector<128x256xf32>
    %cst_77 = arith.constant dense<0.000000e+00> : vector<16x256xf32>
    %217 = tpu.matmul %215, %216, %cst_77 {dimension_numbers = #tpu.dot_dimension_numbers<[1], [0], [0], [1], [0, 0, 1, 1], [], []>} : vector<16x128xf32>, vector<128x256xf32>, vector<16x256xf32> -> vector<16x256xf32>
    %c0_78 = arith.constant 0 : index
    %c0_79 = arith.constant 0 : index
    %218 = vector.load %arg5[%c0_78, %c0_79] : memref<16x256xf32, #tpu.memory_space<vmem>>, vector<16x256xf32>
    %219 = arith.mulf %217, %218 : vector<16x256xf32>
    %cst_80 = arith.constant dense<0.000000e+00> : vector<256xf32>
    %220 = vector.multi_reduction <add>, %219, %cst_80 [0] : vector<16x256xf32> to vector<256xf32>
    %221 = vector.shape_cast %220 : vector<256xf32> to vector<1x256xf32>
    %222 = arith.addf %174, %221 : vector<1x256xf32>
    %223 = arith.mulf %174, %221 : vector<1x256xf32>
    %224 = arith.addf %222, %223 : vector<1x256xf32>
    %cst_81 = arith.constant 0.000000e+00 : f32
    %225 = vector.broadcast %cst_81 : f32 to vector<1x256xf32>
    %226 = arith.cmpf ogt, %224, %225 : vector<1x256xf32>
    %cst_82 = arith.constant 1.000000e+00 : f32
    %cst_83 = arith.constant -1.000000e+00 : f32
    %227 = vector.broadcast %cst_82 : f32 to vector<1x256xf32>
    %228 = vector.broadcast %cst_83 : f32 to vector<1x256xf32>
    %229 = arith.select %226, %227, %228 : vector<1x256xi1>, vector<1x256xf32>
    %c0_84 = arith.constant 0 : index
    %c0_85 = arith.constant 0 : index
    %c0_86 = arith.constant 0 : index
    %230 = vector.load %arg6[%c0_84, %c0_85, %c0_86] : memref<1x1x256xf32, #tpu.memory_space<vmem>>, vector<1x1x256xf32>
    %231 = vector.shape_cast %230 : vector<1x1x256xf32> to vector<1x256xf32>
    %232 = vector.shape_cast %229 : vector<1x256xf32> to vector<1x1x256xf32>
    tpu.vector_store %arg6[%c0_84, %c0_85, %c0_86], %232 {strides = array<i32>} : memref<1x1x256xf32, #tpu.memory_space<vmem>>, vector<1x1x256xf32>,
    return
  }
  func.func @transform_0(%arg0: i32) -> (i32, i32, i32) {
    %c0_i32 = arith.constant 0 : i32
    %c0_i32_0 = arith.constant 0 : i32
    %c0_i32_1 = arith.constant 0 : i32
    return %arg0, %c0_i32, %c0_i32_0 : i32, i32, i32
  }
  func.func @transform_1(%arg0: i32) -> (i32, i32, i32) {
    %c0_i32 = arith.constant 0 : i32
    %c0_i32_0 = arith.constant 0 : i32
    %c0_i32_1 = arith.constant 0 : i32
    return %arg0, %c0_i32, %c0_i32_0 : i32, i32, i32
  }
  func.func @transform_2(%arg0: i32) -> (i32, i32) {
    %c0_i32 = arith.constant 0 : i32
    %c0_i32_0 = arith.constant 0 : i32
    %c0_i32_1 = arith.constant 0 : i32
    return %c0_i32, %c0_i32_0 : i32, i32
  }
  func.func @transform_3(%arg0: i32) -> (i32, i32) {
    %c0_i32 = arith.constant 0 : i32
    %c0_i32_0 = arith.constant 0 : i32
    %c0_i32_1 = arith.constant 0 : i32
    return %c0_i32, %c0_i32_0 : i32, i32
  }
  func.func @transform_4(%arg0: i32) -> (i32, i32) {
    %c0_i32 = arith.constant 0 : i32
    %c0_i32_0 = arith.constant 0 : i32
    %c0_i32_1 = arith.constant 0 : i32
    return %c0_i32, %c0_i32_0 : i32, i32
  }
  func.func @transform_5(%arg0: i32) -> (i32, i32, i32) {
    %c0_i32 = arith.constant 0 : i32
    %c0_i32_0 = arith.constant 0 : i32
    %c0_i32_1 = arith.constant 0 : i32
    return %arg0, %c0_i32, %c0_i32_0 : i32, i32, i32
  }
}

</mosaic_0001>

<llo_original>
// kernel: tpu_custom_call.1
$region0: #{tpu_custom_call.1}
  #allocation0 [shape = 'u32[]', space=smem, size = 0x4, offset = 0x4, fixed_abs, tag = 'smem constant byte address 0x4 - core index']
  #allocation1 [shape = 'u32[144,128]{1,0:T(1,128)}', space=vmem, size = 0x12000, scoped, tag = 'internal scratch']
  %s0 = inlined_call_operand.vmem [shape: f32[2,8,4], index: 0, kind: input, shape index: {}]
  %s1 = inlined_call_operand.vmem [shape: f32[2,1,128], index: 1, kind: input, shape index: {}]
  %s2 = inlined_call_operand.hbm [shape: f32[128,256], index: 2, kind: input, shape index: {}]
  %s3 = inlined_call_operand.hbm [shape: f32[128,256], index: 3, kind: input, shape index: {}]
  %s4 = inlined_call_operand.vmem [shape: f32[16,256], index: 4, kind: input, shape index: {}]
  %s5 = inlined_call_operand.hbm [shape: f32[2,1,256], index: 5, kind: output, shape index: {}]
  %s6 = sld [smem:[#allocation0]]
  $region61: #{tpu_custom_call.1} parent=0
    _
  %s8 = ssub.s32 1, %s6
  %s9 = scalar_select 0, %s8, %s6
  $region1: #{tpu_custom_call.1} parent=0
    #allocation2 [shape = 'u8[131072]{0}', space=vmem, size = 0x20000, scoped, tag = 'input window, operand 2, single buffered']
    #allocation3 [shape = 's32[2]{0}', space=sflag, size = 0x8, scoped, tag = 'scoped memory for tpu_custom_call.1']
    #allocation4 [shape = 's32[2]{0}', space=sflag, size = 0x8, scoped, tag = 'scoped memory for tpu_custom_call.1']
    #allocation5 [shape = 'u8[131072]{0}', space=vmem, size = 0x20000, scoped, tag = 'input window, operand 3, single buffered']
    #allocation6 [shape = 's32[1]{0}', space=sflag, size = 0x4, scoped, tag = 'scoped memory for tpu_custom_call.1']
    #allocation7 [shape = 'u8[2048]{0}', space=vmem, size = 0x800, scoped, tag = 'output window, operand 0']
    %10 = vsyncpa [#allocation3], 0
    %11 = vsyncpa [#allocation6], 0
    %12 = vsyncpa [#allocation4], 0
    %s13 = scalar_lea.sflag [#allocation4], 1
    %14 = vsyncpa %s13, 0
    loop: start=0, step=1, limit=4
    $region2: #{tpu_custom_call.1} parent=1 // loop_pre_header
      _
    $region3: #{tpu_custom_call.1} parent=1 // loop_header
      %s16 = sphi 0, %s20
      %p17 = scmp.ge.s32.totalorder %s16, 4
      %s26 = sphi 0, %s28
      %s29 = sphi 0, %s26
      %s30 = sphi 0, %s29
      %s46 = sphi 0, %s30
      %s52 = sphi 0, %s54
      %s55 = sphi 0, %s52
      %s56 = sphi 0, %s55
      %s72 = sphi 0, %s56
      %s76 = sphi 0, %s76
      %s78 = sphi 0, %s76
      %s79 = sphi 0, %s78
      %s93 = sphi 0, %s79
      %s97 = sphi 0, %s97
      %s99 = sphi 0, %s97
      %s100 = sphi 0, %s99
      %s114 = sphi 0, %s100
      %s118 = sphi 0, %s118
      %s120 = sphi 0, %s118
      %s121 = sphi 0, %s120
      %s135 = sphi 0, %s121
      %s141 = sphi 0, %s143
      %s144 = sphi 0, %s141
      %s145 = sphi 0, %s144
      %s161 = sphi 0, %s145
    $region4: #{tpu_custom_call.1} parent=1 // loop_header_branch
      %19 = sbr.rel (%p17) target = $region8
    $region5: #{tpu_custom_call.1} parent=1 // loop_body
      %s21 = ssub.s32 %s16, 1
      %s22 = ssub.s32 %s16, 2
      %s23 = sadd.s32 %s16, 1
      %s24 = ssub.s32 %s16, %s23
      %p25 = scmp.eq.s32.totalorder %s24, 0
      %s27 = sadd.s32 %s26, 1
      %s28 = scalar_select %p25, %s26, %s27
      %p31 = pneg %p25
      %p32 = scmp.eq.s32.totalorder %s16, 1
      %p33 = por %p31, %p32
      %p34 = scmp.ne.s32.totalorder %s26, %s29
      %p35 = scmp.eq.s32.totalorder %s16, 0
      %p36 = por %p34, %p35
      %p37 = scmp.ne.s32.totalorder %s26, %s29
      %p38 = scmp.eq.s32.totalorder %s21, 1
      %p39 = por %p37, %p38
      %p40 = scmp.ne.s32.totalorder %s29, %s30
      %p41 = scmp.eq.s32.totalorder %s21, 0
      %p42 = por %p40, %p41
      %p43 = scmp.ne.s32.totalorder %s29, %s30
      %p44 = scmp.eq.s32.totalorder %s22, 1
      %p45 = por %p43, %p44
      %p47 = scmp.ne.s32.totalorder %s30, %s46
      %p48 = scmp.eq.s32.totalorder %s22, 0
      %p49 = por %p47, %p48
      %s50 = ssub.s32 %s16, %s23
      %p51 = scmp.eq.s32.totalorder %s50, 0
      %s53 = sadd.s32 %s52, 1
      %s54 = scalar_select %p51, %s52, %s53
      %p57 = pneg %p51
      %p58 = scmp.eq.s32.totalorder %s16, 1
      %p59 = por %p57, %p58
      %p60 = scmp.ne.s32.totalorder %s52, %s55
      %p61 = scmp.eq.s32.totalorder %s16, 0
      %p62 = por %p60, %p61
      %p63 = scmp.ne.s32.totalorder %s52, %s55
      %p64 = scmp.eq.s32.totalorder %s21, 1
      %p65 = por %p63, %p64
      %p66 = scmp.ne.s32.totalorder %s55, %s56
      %p67 = scmp.eq.s32.totalorder %s21, 0
      %p68 = por %p66, %p67
      %p69 = scmp.ne.s32.totalorder %s55, %s56
      %p70 = scmp.eq.s32.totalorder %s22, 1
      %p71 = por %p69, %p70
      %p73 = scmp.ne.s32.totalorder %s56, %s72
      %p74 = scmp.eq.s32.totalorder %s22, 0
      %p75 = por %p73, %p74
      %s77 = sadd.s32 %s76, 1
      %p80 = scmp.eq.s32.totalorder %s16, 1
      %p81 = scmp.ne.s32.totalorder %s76, %s78
      %p82 = scmp.eq.s32.totalorder %s16, 0
      %p83 = por %p81, %p82
      %p84 = scmp.ne.s32.totalorder %s76, %s78
      %p85 = scmp.eq.s32.totalorder %s21, 1
      %p86 = por %p84, %p85
      %p87 = scmp.ne.s32.totalorder %s78, %s79
      %p88 = scmp.eq.s32.totalorder %s21, 0
      %p89 = por %p87, %p88
      %p90 = scmp.ne.s32.totalorder %s78, %s79
      %p91 = scmp.eq.s32.totalorder %s22, 1
      %p92 = por %p90, %p91
      %p94 = scmp.ne.s32.totalorder %s79, %s93
      %p95 = scmp.eq.s32.totalorder %s22, 0
      %p96 = por %p94, %p95
      %s98 = sadd.s32 %s97, 1
      %p101 = scmp.eq.s32.totalorder %s16, 1
      %p102 = scmp.ne.s32.totalorder %s97, %s99
      %p103 = scmp.eq.s32.totalorder %s16, 0
      %p104 = por %p102, %p103
      %p105 = scmp.ne.s32.totalorder %s97, %s99
      %p106 = scmp.eq.s32.totalorder %s21, 1
      %p107 = por %p105, %p106
      %p108 = scmp.ne.s32.totalorder %s99, %s100
      %p109 = scmp.eq.s32.totalorder %s21, 0
      %p110 = por %p108, %p109
      %p111 = scmp.ne.s32.totalorder %s99, %s100
      %p112 = scmp.eq.s32.totalorder %s22, 1
      %p113 = por %p111, %p112
      %p115 = scmp.ne.s32.totalorder %s100, %s114
      %p116 = scmp.eq.s32.totalorder %s22, 0
      %p117 = por %p115, %p116
      %s119 = sadd.s32 %s118, 1
      %p122 = scmp.eq.s32.totalorder %s16, 1
      %p123 = scmp.ne.s32.totalorder %s118, %s120
      %p124 = scmp.eq.s32.totalorder %s16, 0
      %p125 = por %p123, %p124
      %p126 = scmp.ne.s32.totalorder %s118, %s120
      %p127 = scmp.eq.s32.totalorder %s21, 1
      %p128 = por %p126, %p127
      %p129 = scmp.ne.s32.totalorder %s120, %s121
      %p130 = scmp.eq.s32.totalorder %s21, 0
      %p131 = por %p129, %p130
      %p132 = scmp.ne.s32.totalorder %s120, %s121
      %p133 = scmp.eq.s32.totalorder %s22, 1
      %p134 = por %p132, %p133
      %p136 = scmp.ne.s32.totalorder %s121, %s135
      %p137 = scmp.eq.s32.totalorder %s22, 0
      %p138 = por %p136, %p137
      %s139 = ssub.s32 %s16, %s23
      %p140 = scmp.eq.s32.totalorder %s139, 0
      %s142 = sadd.s32 %s141, 1
      %s143 = scalar_select %p140, %s141, %s142
      %p146 = pneg %p140
      %p147 = scmp.eq.s32.totalorder %s16, 1
      %p148 = por %p146, %p147
      %p149 = scmp.ne.s32.totalorder %s141, %s144
      %p150 = scmp.eq.s32.totalorder %s16, 0
      %p151 = por %p149, %p150
      %p152 = scmp.ne.s32.totalorder %s141, %s144
      %p153 = scmp.eq.s32.totalorder %s21, 1
      %p154 = por %p152, %p153
      %p155 = scmp.ne.s32.totalorder %s144, %s145
      %p156 = scmp.eq.s32.totalorder %s21, 0
      %p157 = por %p155, %p156
      %p158 = scmp.ne.s32.totalorder %s144, %s145
      %p159 = scmp.eq.s32.totalorder %s22, 1
      %p160 = por %p158, %p159
      %p162 = scmp.ne.s32.totalorder %s145, %s161
      %p163 = scmp.eq.s32.totalorder %s22, 0
      %p164 = por %p162, %p163
      %p165 = scmp.le.s32.totalorder 1, %s16
      %p166 = scmp.lt.s32.totalorder %s16, 3
      %p167 = pnand %p165, %p166
      %p168 = pneg %p167
      // Predicated region
      $region9: #{tpu_custom_call.1} parent=5 // pred_check
        _
      $region10: #{tpu_custom_call.1} parent=5 // pred_check_branch
        %170 = sbr.rel (%p167) target = $region12
      $region11: #{tpu_custom_call.1} parent=5 // pred_region
        %s171 = ssub.s32 %s16, 1
        // Predicated region
        $region13: #{tpu_custom_call.1} parent=11 // pred_check
          %p172 = pneg %p89
        $region14: #{tpu_custom_call.1} parent=11 // pred_check_branch
          %174 = sbr.rel (%p172) target = $region16
        $region15: #{tpu_custom_call.1} parent=11 // pred_region
          %s176 = ssub.s32 4096, 4096
          %177 = vsyncadd [#allocation3], %s176
          %s178 = sshll.u32 [#allocation2], 4
          %s179 = int_to_ptr.vmem [resolvable:$true] %s178
          %184 = dma.hbm_to_vmem [thread:$0]  %s2, 4096, %s179, [#allocation3], 256, 256, 16
        $region16: #{tpu_custom_call.1} parent=11 // pred_fallthru
          _
        // Predicated region
        $region17: #{tpu_custom_call.1} parent=11 // pred_check
          %p185 = pneg %p110
        $region18: #{tpu_custom_call.1} parent=11 // pred_check_branch
          %187 = sbr.rel (%p185) target = $region20
        $region19: #{tpu_custom_call.1} parent=11 // pred_region
          %s189 = ssub.s32 4096, 4096
          %190 = vsyncadd [#allocation6], %s189
          %s191 = sshll.u32 [#allocation5], 4
          %s192 = int_to_ptr.vmem [resolvable:$true] %s191
          %197 = dma.hbm_to_vmem [thread:$0]  %s3, 4096, %s192, [#allocation6], 256, 256, 16
        $region20: #{tpu_custom_call.1} parent=11 // pred_fallthru
          _
        // Predicated region
        $region21: #{tpu_custom_call.1} parent=11 // pred_check
          %p198 = pneg %p131
        $region22: #{tpu_custom_call.1} parent=11 // pred_check_branch
          %200 = sbr.rel (%p198) target = $region24
        $region23: #{tpu_custom_call.1} parent=11 // pred_region
          _
        $region24: #{tpu_custom_call.1} parent=11 // pred_fallthru
          _
      $region12: #{tpu_custom_call.1} parent=5 // pred_fallthru
        _
      %p201 = scmp.lt.s32.totalorder %s16, 2
      // Predicated region
      $region25: #{tpu_custom_call.1} parent=5 // pred_check
        %p202 = pneg %p201
      $region26: #{tpu_custom_call.1} parent=5 // pred_check_branch
        %204 = sbr.rel (%p202) target = $region28
      $region27: #{tpu_custom_call.1} parent=5 // pred_region
        // Predicated region
        $region29: #{tpu_custom_call.1} parent=27 // pred_check
          %p205 = pneg %p36
        $region30: #{tpu_custom_call.1} parent=27 // pred_check_branch
          %207 = sbr.rel (%p205) target = $region32
        $region31: #{tpu_custom_call.1} parent=27 // pred_region
          %p208 = scmp.lt.s32.totalorder %s16, 1
          %s209 = scalar_select %p208, %s16, 1
          %s210 = smul.addr %s209, 8
          %s211 = scalar_lea.vmem %s0, %s210
        $region32: #{tpu_custom_call.1} parent=27 // pred_fallthru
          _
        // Predicated region
        $region33: #{tpu_custom_call.1} parent=27 // pred_check
          %p212 = pneg %p62
        $region34: #{tpu_custom_call.1} parent=27 // pred_check_branch
          %214 = sbr.rel (%p212) target = $region36
        $region35: #{tpu_custom_call.1} parent=27 // pred_region
          %p215 = scmp.lt.s32.totalorder %s16, 1
          %s216 = scalar_select %p215, %s16, 1
          %s217 = scalar_lea.vmem %s1, %s216
        $region36: #{tpu_custom_call.1} parent=27 // pred_fallthru
          _
      $region28: #{tpu_custom_call.1} parent=5 // pred_fallthru
        _
      %p218 = scmp.le.s32.totalorder 1, %s16
      %p219 = scmp.lt.s32.totalorder %s16, 3
      %p220 = pnand %p218, %p219
      %p221 = pneg %p220
      // Predicated region
      $region37: #{tpu_custom_call.1} parent=5 // pred_check
        _
      $region38: #{tpu_custom_call.1} parent=5 // pred_check_branch
        %223 = sbr.rel (%p220) target = $region40
      $region39: #{tpu_custom_call.1} parent=5 // pred_region
        %s224 = ssub.s32 %s16, 1
        // Predicated region
        $region41: #{tpu_custom_call.1} parent=39 // pred_check
          %p225 = pneg %p89
        $region42: #{tpu_custom_call.1} parent=39 // pred_check_branch
          %227 = sbr.rel (%p225) target = $region44
        $region43: #{tpu_custom_call.1} parent=39 // pred_region
          %228 = dma.done [#allocation3], 4096
        $region44: #{tpu_custom_call.1} parent=39 // pred_fallthru
          _
        // Predicated region
        $region45: #{tpu_custom_call.1} parent=39 // pred_check
          %p229 = pneg %p110
        $region46: #{tpu_custom_call.1} parent=39 // pred_check_branch
          %231 = sbr.rel (%p229) target = $region48
        $region47: #{tpu_custom_call.1} parent=39 // pred_region
          %232 = dma.done [#allocation6], 4096
        $region48: #{tpu_custom_call.1} parent=39 // pred_fallthru
          _
        %p233 = scmp.lt.s32.totalorder %s21, 1
        %s234 = scalar_select %p233, %s21, 1
        %s235 = smul.addr %s234, 8
        %s236 = scalar_lea.vmem %s0, %s235
        %p237 = pneg %p42
        %p238 = pneg %p39
        %p239 = scmp.lt.s32.totalorder %s21, 1
        %s240 = scalar_select %p239, %s21, 1
        %s241 = scalar_lea.vmem %s1, %s240
        %p242 = pneg %p68
        %p243 = pneg %p65
        %p244 = pneg %p89
        %p245 = pneg %p86
        %p246 = pneg %p110
        %p247 = pneg %p107
        %p248 = pneg %p131
        %p249 = pneg %p128
        %p250 = pneg %p157
        %p251 = pneg %p154
        %s252 = sand.u32 %s144, 1
        %s253 = scalar_lea.sflag [#allocation4], %s252
        %s254 = sand.u32 %s144, 1
        %s255 = smul.addr %s254, 2
        %s256 = scalar_lea.vmem [#allocation7], %s255
        %p257 = scmp.lt.s32.totalorder %s21, 1
        %s258 = scalar_select %p257, %s21, 1
        %s259 = smul.addr %s258, 8
        %s260 = scalar_lea.vmem %s0, %s259
        %p261 = scmp.lt.s32.totalorder %s21, 1
        %s262 = scalar_select %p261, %s21, 1
        %s263 = scalar_lea.vmem %s1, %s262
        %v264 = vld [vmem:[%s260] sm:$0xff]
        %v265 = vlaneseq
        %v266 = vand.u32 %v265, 127
        %v267 = vcvt.s32.f32 %v266
        %v268 = vmax.f32 %v264, -5.0
        %v269 = vmin.f32 %v268, 5.0
        %v270 = vsub.f32 %v269, -5.0
        %v271 = vrcp.pop 10.0
        %v272 = vmul.f32 %v270, %v271
        %v273 = vmul.f32 %v272, 15.0
        %v274 = vfloor.f32 %v273
        %v275 = vsub.f32 %v273, %v274
        %v276 = vadd.f32 %v274, 1.0
        %vm277 = vcmp.gt.f32.partialorder %v275, 0.5
        %v278 = vsel %vm277, %v276, %v274
        %v279 = vmul.f32 %v274, 0.5
        %v280 = vfloor.f32 %v279
        %v281 = vmul.f32 %v280, 2.0
        %v282 = vsub.f32 %v274, %v281
        %vm283 = vcmp.ne.f32.partialorder %v282, 0.0
        %vm284 = vcmp.eq.f32.partialorder %v275, 0.5
        %v285 = vsel %vm283, %v276, %v274
        %v286 = vsel %vm284, %v285, %v278
        %v287 = vmax.f32 %v286, 0.0
        %v288 = vmin.f32 %v287, 15.0
        %v289 = vadd.f32 %v288, 16.0
        %v290 = vadd.f32 %v288, 32.0
        %v291 = vlaneseq
        %v292 = vshrl.u32 %v291, 7
        %v293 = vcvt.s32.f32 %v292
        %v294 = vmax.f32 %v293, 0.0
        %v295 = vmin.f32 %v294, 8.0
        %v296 = vrcp.pop 8.0
        %v297 = vmul.f32 %v295, %v296
        %v298 = vmul.f32 %v297, 7.0
        %v299 = vfloor.f32 %v298
        %v300 = vsub.f32 %v298, %v299
        %v301 = vadd.f32 %v299, 1.0
        %vm302 = vcmp.gt.f32.partialorder %v300, 0.5
        %v303 = vsel %vm302, %v301, %v299
        %v304 = vmul.f32 %v299, 0.5
        %v305 = vfloor.f32 %v304
        %v306 = vmul.f32 %v305, 2.0
        %v307 = vsub.f32 %v299, %v306
        %vm308 = vcmp.ne.f32.partialorder %v307, 0.0
        %vm309 = vcmp.eq.f32.partialorder %v300, 0.5
        %v310 = vsel %vm308, %v301, %v299
        %v311 = vsel %vm309, %v310, %v303
        %v312 = vmax.f32 %v311, 0.0
        %v313 = vmin.f32 %v312, 7.0
        %v314 = vadd.f32 %v313, 48.0
        %316 = vset.pattern.permute.xlu0 1
        %317 = vperm.xlu0 %316, %v288
        %v318 = vpop.permute.xlu0 %317
        %vm320 = vcmp.eq.f32.partialorder %v267, %v318
        %322 = vset.pattern.permute.xlu0 2
        %323 = vperm.xlu0 %322, %v289
        %v324 = vpop.permute.xlu0 %323
        %vm326 = vcmp.eq.f32.partialorder %v267, %v324
        %vm327 = vmor %vm320, %vm326
        %329 = vset.pattern.permute.xlu0 3
        %330 = vperm.xlu0 %329, %v290
        %v331 = vpop.permute.xlu0 %330
        %vm333 = vcmp.eq.f32.partialorder %v267, %v331
        %vm334 = vmor %vm327, %vm333
        %v335 = vsel %vm334, 1, 0
        %v336 = vcvt.s32.f32 %v335
        %vm337 = vcmp.eq.f32.partialorder %v267, %v314
        %v338 = vsel %vm337, 1, 0
        %v339 = vcvt.s32.f32 %v338
        %v340 = vld [vmem:[#allocation2] sm:$0xff]
        %v341 = vld [vmem:[#allocation2 + $0x8] sm:$0xff]
        %v342 = vld [vmem:[#allocation2 + $0x10] sm:$0xff]
        %v343 = vld [vmem:[#allocation2 + $0x18] sm:$0xff]
        %v344 = vld [vmem:[#allocation2 + $0x20] sm:$0xff]
        %v345 = vld [vmem:[#allocation2 + $0x28] sm:$0xff]
        %v346 = vld [vmem:[#allocation2 + $0x30] sm:$0xff]
        %v347 = vld [vmem:[#allocation2 + $0x38] sm:$0xff]
        %v348 = vld [vmem:[#allocation2 + $0x40] sm:$0xff]
        %v349 = vld [vmem:[#allocation2 + $0x48] sm:$0xff]
        %v350 = vld [vmem:[#allocation2 + $0x50] sm:$0xff]
        %v351 = vld [vmem:[#allocation2 + $0x58] sm:$0xff]
        %v352 = vld [vmem:[#allocation2 + $0x60] sm:$0xff]
        %v353 = vld [vmem:[#allocation2 + $0x68] sm:$0xff]
        %v354 = vld [vmem:[#allocation2 + $0x70] sm:$0xff]
        %v355 = vld [vmem:[#allocation2 + $0x78] sm:$0xff]
        %v356 = vld [vmem:[#allocation2 + $0x80] sm:$0xff]
        %v357 = vld [vmem:[#allocation2 + $0x88] sm:$0xff]
        %v358 = vld [vmem:[#allocation2 + $0x90] sm:$0xff]
        %v359 = vld [vmem:[#allocation2 + $0x98] sm:$0xff]
        %v360 = vld [vmem:[#allocation2 + $0xa0] sm:$0xff]
        %v361 = vld [vmem:[#allocation2 + $0xa8] sm:$0xff]
        %v362 = vld [vmem:[#allocation2 + $0xb0] sm:$0xff]
        %v363 = vld [vmem:[#allocation2 + $0xb8] sm:$0xff]
        %v364 = vld [vmem:[#allocation2 + $0xc0] sm:$0xff]
        %v365 = vld [vmem:[#allocation2 + $0xc8] sm:$0xff]
        %v366 = vld [vmem:[#allocation2 + $0xd0] sm:$0xff]
        %v367 = vld [vmem:[#allocation2 + $0xd8] sm:$0xff]
        %v368 = vld [vmem:[#allocation2 + $0xe0] sm:$0xff]
        %v369 = vld [vmem:[#allocation2 + $0xe8] sm:$0xff]
        %v370 = vld [vmem:[#allocation2 + $0xf0] sm:$0xff]
        %v371 = vld [vmem:[#allocation2 + $0xf8] sm:$0xff]
        %372 = vmatprep.subr.mxu0 %v341
        %373 = vmatpush1.msra.mxu0 %v340
        %374 = vmatprep.subr.mxu0 %v343
        %375 = vmatpush1.msra.mxu0 %v342
        %376 = vmatprep.subr.mxu0 %v345
        %377 = vmatpush1.msra.mxu0 %v344
        %378 = vmatprep.subr.mxu0 %v347
        %379 = vmatpush1.msra.mxu0 %v346
        %380 = vmatprep.subr.mxu0 %v349
        %381 = vmatpush1.msra.mxu0 %v348
        %382 = vmatprep.subr.mxu0 %v351
        %383 = vmatpush1.msra.mxu0 %v350
        %384 = vmatprep.subr.mxu0 %v353
        %385 = vmatpush1.msra.mxu0 %v352
        %386 = vmatprep.subr.mxu0 %v355
        %387 = vmatpush1.msra.mxu0 %v354
        %388 = vmatprep.subr.mxu0 %v357
        %389 = vmatpush1.msra.mxu0 %v356
        %390 = vmatprep.subr.mxu0 %v359
        %391 = vmatpush1.msra.mxu0 %v358
        %392 = vmatprep.subr.mxu0 %v361
        %393 = vmatpush1.msra.mxu0 %v360
        %394 = vmatprep.subr.mxu0 %v363
        %395 = vmatpush1.msra.mxu0 %v362
        %396 = vmatprep.subr.mxu0 %v365
        %397 = vmatpush1.msra.mxu0 %v364
        %398 = vmatprep.subr.mxu0 %v367
        %399 = vmatpush1.msra.mxu0 %v366
        %400 = vmatprep.subr.mxu0 %v369
        %401 = vmatpush1.msra.mxu0 %v368
        %402 = vmatprep.subr.mxu0 %v371
        %403 = vmatpush1.msra.mxu0 %v370
        %404 = vmatprep.subr.mxu0 0.0
        %405 = vmatpush1.msra.mxu0 0.0
        %406 = vmatprep.subr.mxu0 0.0
        %407 = vmatpush1.msra.mxu0 0.0
        %408 = vmatprep.subr.mxu0 0.0
        %409 = vmatpush1.msra.mxu0 0.0
        %410 = vmatprep.subr.mxu0 0.0
        %411 = vmatpush1.msra.mxu0 0.0
        %412 = vmatprep.subr.mxu0 0.0
        %413 = vmatpush1.msra.mxu0 0.0
        %414 = vmatprep.subr.mxu0 0.0
        %415 = vmatpush1.msra.mxu0 0.0
        %416 = vmatprep.subr.mxu0 0.0
        %417 = vmatpush1.msra.mxu0 0.0
        %418 = vmatprep.subr.mxu0 0.0
        %419 = vmatpush1.msra.mxu0 0.0
        %420 = vmatprep.subr.mxu0 0.0
        %421 = vmatpush1.msra.mxu0 0.0
        %422 = vmatprep.subr.mxu0 0.0
        %423 = vmatpush1.msra.mxu0 0.0
        %424 = vmatprep.subr.mxu0 0.0
        %425 = vmatpush1.msra.mxu0 0.0
        %426 = vmatprep.subr.mxu0 0.0
        %427 = vmatpush1.msra.mxu0 0.0
        %428 = vmatprep.subr.mxu0 0.0
        %429 = vmatpush1.msra.mxu0 0.0
        %430 = vmatprep.subr.mxu0 0.0
        %431 = vmatpush1.msra.mxu0 0.0
        %432 = vmatprep.subr.mxu0 0.0
        %433 = vmatpush1.msra.mxu0 0.0
        %434 = vmatprep.subr.mxu0 0.0
        %435 = vmatpush1.msra.mxu0 0.0
        %436 = vmatprep.mubr.f32.mxu0 0.0
        %437 = vmatmul.mubr.f32.gmra.mrb[0].mxu0 %v336
        %v438 = vpop.f32.mrb[0].mxu0
        %v439 = vadd.f32 0.0, %v438
        %v440 = vpop.f32.mrb[0].mxu0
        %v441 = vadd.f32 0.0, %v440
        %442 = vmatprep.mubr.f32.mxu0 0.0
        %443 = vmatmul.mubr.f32.gmra.mrb[0].mxu0 %v339
        %v444 = vpop.f32.mrb[0].mxu0
        %v445 = vadd.f32 0.0, %v444
        %v446 = vpop.f32.mrb[0].mxu0
        %v447 = vadd.f32 0.0, %v446
        %448 = vdwg.mxu0
        %v449 = vmul.f32 %v439, %v445
        %v450 = vmul.f32 %v441, %v447
        %v453 = vrot.slane %v449, 4
        %v454 = vrot.slane %v450, 4
        %v457 = vmul.f32 %v449, %v453
        %v458 = vmul.f32 %v450, %v454
        %v461 = vrot.slane %v457, 2
        %v462 = vrot.slane %v458, 2
        %v465 = vmul.f32 %v457, %v461
        %v466 = vmul.f32 %v458, %v462
        %v469 = vrot.slane %v465, 1
        %v470 = vrot.slane %v466, 1
        %v473 = vmul.f32 %v465, %v469
        %v474 = vmul.f32 %v466, %v470
        %v475 = vld [vmem:[%s263] sm:$0x1]
        %v476 = vmax.f32 %v475, 0.0
        %v477 = vmin.f32 %v476, 1.0
        %v478 = vmul.f32 %v477, 15.0
        %v479 = vfloor.f32 %v478
        %v480 = vsub.f32 %v478, %v479
        %v481 = vadd.f32 %v479, 1.0
        %vm482 = vcmp.gt.f32.partialorder %v480, 0.5
        %v483 = vsel %vm482, %v481, %v479
        %v484 = vmul.f32 %v479, 0.5
        %v485 = vfloor.f32 %v484
        %v486 = vmul.f32 %v485, 2.0
        %v487 = vsub.f32 %v479, %v486
        %vm488 = vcmp.ne.f32.partialorder %v487, 0.0
        %vm489 = vcmp.eq.f32.partialorder %v480, 0.5
        %v490 = vsel %vm488, %v481, %v479
        %v491 = vsel %vm489, %v490, %v483
        %v492 = vmax.f32 %v491, 0.0
        %v493 = vmin.f32 %v492, 15.0
        %v494 = vadd.s32 %v292, 8
        %v495 = vcvt.s32.f32 %v494
        %v497 = vlaneseq
        %v498 = vshrl.u32 %v497, 7
        %v499 = vsub.s32 0, %v498
        %v500 = vrot.slane %v493, %v499
        %vm502 = vcmp.eq.f32.partialorder %v293, %v500
        %vm503 = vcmp.eq.f32.partialorder %v495, %v500
        %v504 = vsel %vm502, 1, 0
        %v505 = vsel %vm503, 1, 0
        %v506 = vcvt.s32.f32 %v504
        %v507 = vcvt.s32.f32 %v505
        %v508 = vld [vmem:[#allocation5] sm:$0xff]
        %v509 = vld [vmem:[#allocation5 + $0x8] sm:$0xff]
        %v510 = vld [vmem:[#allocation5 + $0x10] sm:$0xff]
        %v511 = vld [vmem:[#allocation5 + $0x18] sm:$0xff]
        %v512 = vld [vmem:[#allocation5 + $0x20] sm:$0xff]
        %v513 = vld [vmem:[#allocation5 + $0x28] sm:$0xff]
        %v514 = vld [vmem:[#allocation5 + $0x30] sm:$0xff]
        %v515 = vld [vmem:[#allocation5 + $0x38] sm:$0xff]
        %v516 = vld [vmem:[#allocation5 + $0x40] sm:$0xff]
        %v517 = vld [vmem:[#allocation5 + $0x48] sm:$0xff]
        %v518 = vld [vmem:[#allocation5 + $0x50] sm:$0xff]
        %v519 = vld [vmem:[#allocation5 + $0x58] sm:$0xff]
        %v520 = vld [vmem:[#allocation5 + $0x60] sm:$0xff]
        %v521 = vld [vmem:[#allocation5 + $0x68] sm:$0xff]
        %v522 = vld [vmem:[#allocation5 + $0x70] sm:$0xff]
        %v523 = vld [vmem:[#allocation5 + $0x78] sm:$0xff]
        %v524 = vld [vmem:[#allocation5 + $0x80] sm:$0xff]
        %v525 = vld [vmem:[#allocation5 + $0x88] sm:$0xff]
        %v526 = vld [vmem:[#allocation5 + $0x90] sm:$0xff]
        %v527 = vld [vmem:[#allocation5 + $0x98] sm:$0xff]
        %v528 = vld [vmem:[#allocation5 + $0xa0] sm:$0xff]
        %v529 = vld [vmem:[#allocation5 + $0xa8] sm:$0xff]
        %v530 = vld [vmem:[#allocation5 + $0xb0] sm:$0xff]
        %v531 = vld [vmem:[#allocation5 + $0xb8] sm:$0xff]
        %v532 = vld [vmem:[#allocation5 + $0xc0] sm:$0xff]
        %v533 = vld [vmem:[#allocation5 + $0xc8] sm:$0xff]
        %v534 = vld [vmem:[#allocation5 + $0xd0] sm:$0xff]
        %v535 = vld [vmem:[#allocation5 + $0xd8] sm:$0xff]
        %v536 = vld [vmem:[#allocation5 + $0xe0] sm:$0xff]
        %v537 = vld [vmem:[#allocation5 + $0xe8] sm:$0xff]
        %v538 = vld [vmem:[#allocation5 + $0xf0] sm:$0xff]
        %v539 = vld [vmem:[#allocation5 + $0xf8] sm:$0xff]
        %540 = vmatprep.subr.mxu0 %v509
        %541 = vmatpush1.msra.mxu0 %v508
        %542 = vmatprep.subr.mxu0 %v511
        %543 = vmatpush1.msra.mxu0 %v510
        %544 = vmatprep.subr.mxu0 %v513
        %545 = vmatpush1.msra.mxu0 %v512
        %546 = vmatprep.subr.mxu0 %v515
        %547 = vmatpush1.msra.mxu0 %v514
        %548 = vmatprep.subr.mxu0 %v517
        %549 = vmatpush1.msra.mxu0 %v516
        %550 = vmatprep.subr.mxu0 %v519
        %551 = vmatpush1.msra.mxu0 %v518
        %552 = vmatprep.subr.mxu0 %v521
        %553 = vmatpush1.msra.mxu0 %v520
        %554 = vmatprep.subr.mxu0 %v523
        %555 = vmatpush1.msra.mxu0 %v522
        %556 = vmatprep.subr.mxu0 %v525
        %557 = vmatpush1.msra.mxu0 %v524
        %558 = vmatprep.subr.mxu0 %v527
        %559 = vmatpush1.msra.mxu0 %v526
        %560 = vmatprep.subr.mxu0 %v529
        %561 = vmatpush1.msra.mxu0 %v528
        %562 = vmatprep.subr.mxu0 %v531
        %563 = vmatpush1.msra.mxu0 %v530
        %564 = vmatprep.subr.mxu0 %v533
        %565 = vmatpush1.msra.mxu0 %v532
        %566 = vmatprep.subr.mxu0 %v535
        %567 = vmatpush1.msra.mxu0 %v534
        %568 = vmatprep.subr.mxu0 %v537
        %569 = vmatpush1.msra.mxu0 %v536
        %570 = vmatprep.subr.mxu0 %v539
        %571 = vmatpush1.msra.mxu0 %v538
        %572 = vmatprep.subr.mxu0 0.0
        %573 = vmatpush1.msra.mxu0 0.0
        %574 = vmatprep.subr.mxu0 0.0
        %575 = vmatpush1.msra.mxu0 0.0
        %576 = vmatprep.subr.mxu0 0.0
        %577 = vmatpush1.msra.mxu0 0.0
        %578 = vmatprep.subr.mxu0 0.0
        %579 = vmatpush1.msra.mxu0 0.0
        %580 = vmatprep.subr.mxu0 0.0
        %581 = vmatpush1.msra.mxu0 0.0
        %582 = vmatprep.subr.mxu0 0.0
        %583 = vmatpush1.msra.mxu0 0.0
        %584 = vmatprep.subr.mxu0 0.0
        %585 = vmatpush1.msra.mxu0 0.0
        %586 = vmatprep.subr.mxu0 0.0
        %587 = vmatpush1.msra.mxu0 0.0
        %588 = vmatprep.subr.mxu0 0.0
        %589 = vmatpush1.msra.mxu0 0.0
        %590 = vmatprep.subr.mxu0 0.0
        %591 = vmatpush1.msra.mxu0 0.0
        %592 = vmatprep.subr.mxu0 0.0
        %593 = vmatpush1.msra.mxu0 0.0
        %594 = vmatprep.subr.mxu0 0.0
        %595 = vmatpush1.msra.mxu0 0.0
        %596 = vmatprep.subr.mxu0 0.0
        %597 = vmatpush1.msra.mxu0 0.0
        %598 = vmatprep.subr.mxu0 0.0
        %599 = vmatpush1.msra.mxu0 0.0
        %600 = vmatprep.subr.mxu0 0.0
        %601 = vmatpush1.msra.mxu0 0.0
        %602 = vmatprep.subr.mxu0 0.0
        %603 = vmatpush1.msra.mxu0 0.0
        %604 = vmatprep.mubr.f32.mxu0 0.0
        %605 = vmatmul.mubr.f32.gmra.mrb[0].mxu0 %v506
        %v606 = vpop.f32.mrb[0].mxu0
        %v607 = vadd.f32 0.0, %v606
        %v608 = vpop.f32.mrb[0].mxu0
        %v609 = vadd.f32 0.0, %v608
        %610 = vmatprep.mubr.f32.mxu0 0.0
        %611 = vmatmul.mubr.f32.gmra.mrb[0].mxu0 %v507
        %v612 = vpop.f32.mrb[0].mxu0
        %v613 = vadd.f32 0.0, %v612
        %v614 = vpop.f32.mrb[0].mxu0
        %v615 = vadd.f32 0.0, %v614
        %616 = vdwg.mxu0
        %v617 = vld [vmem:[%s4] sm:$0xff]
        %v618 = vld [vmem:[%s4 + $0x8] sm:$0xff]
        %v619 = vld [vmem:[%s4 + $0x10] sm:$0xff]
        %v620 = vld [vmem:[%s4 + $0x18] sm:$0xff]
        %v621 = vmul.f32 %v607, %v617
        %v622 = vmul.f32 %v609, %v618
        %v623 = vmul.f32 %v613, %v619
        %v624 = vmul.f32 %v615, %v620
        %v625 = vadd.f32 %v621, %v623
        %v626 = vrot.slane %v625, 4
        %v627 = vadd.f32 %v625, %v626
        %v628 = vrot.slane %v627, 2
        %v629 = vadd.f32 %v627, %v628
        %v630 = vrot.slane %v629, 1
        %v631 = vadd.f32 %v629, %v630
        %v632 = vadd.f32 %v622, %v624
        %v633 = vrot.slane %v632, 4
        %v634 = vadd.f32 %v632, %v633
        %v635 = vrot.slane %v634, 2
        %v636 = vadd.f32 %v634, %v635
        %v637 = vrot.slane %v636, 1
        %v638 = vadd.f32 %v636, %v637
        %v639 = vadd.f32 %v473, %v631
        %v640 = vadd.f32 %v474, %v638
        %v641 = vmul.f32 %v473, %v631
        %v642 = vmul.f32 %v474, %v638
        %v643 = vadd.f32 %v639, %v641
        %v644 = vadd.f32 %v640, %v642
        %vm645 = vcmp.gt.f32.partialorder %v643, 0.0
        %vm646 = vcmp.gt.f32.partialorder %v644, 0.0
        %v647 = vsel %vm645, 1.0, -1.0
        %v648 = vsel %vm646, 1.0, -1.0
        %v651 = vcombine.low %v647, %v648
        %v653 = vunpack.c.l.s4 1966171168
        %v654 = vunpack.c.0.s8 %v653
        %v655 = vlaneseq
        %v656 = vshrl.u32 %v655, 7
        %v657 = vsub.s32 %v654, %v656
        %v658 = vrot.slane %v651, %v657
        %v660 = vunpack.c.l.s4 1966171168
        %v661 = vunpack.c.0.s8 %v660
        %v662 = vlaneseq
        %v663 = vshrl.u32 %v662, 7
        %v664 = vsub.s32 %v661, %v663
        %v665 = vrot.slane %v658, %v664
        %v667 = vlaneseq
        %vm668 = vcmp.ge.s32.totalorder %v667, 0
        %vm669 = vcmp.lt.s32.totalorder %v667, 256
        %vm670 = vmand %vm668, %vm669
        %671 = vst.msk [vmem:[%s256] sm:$0x3] %vm670, %v665
        %s672 = sand.u32 %s144, 1
        %s673 = scalar_lea.sflag [#allocation4], %s672
        %s674 = sand.u32 %s144, 1
        %s675 = smul.addr %s674, 2
        %s676 = scalar_lea.vmem [#allocation7], %s675
        // Predicated region
        $region49: #{tpu_custom_call.1} parent=39 // pred_check
          %p677 = pneg %p154
        $region50: #{tpu_custom_call.1} parent=39 // pred_check_branch
          %679 = sbr.rel (%p677) target = $region52
        $region51: #{tpu_custom_call.1} parent=39 // pred_region
          %s681 = ssub.s32 32, 32
          %682 = vsyncadd %s673, %s681
          %s683 = smul.addr %s21, 2
          %s684 = smul.addr %s683, 16
          %s685 = scalar_lea.hbm %s5, %s684
          %s687 = sshll.u32 %s676, 4
          %s688 = int_to_ptr.vmem [resolvable:$true] %s687
          %690 = dma.vmem_to_hbm [thread:$0]  %s688, 32, %s685, %s673
        $region52: #{tpu_custom_call.1} parent=39 // pred_fallthru
          _
      $region40: #{tpu_custom_call.1} parent=5 // pred_fallthru
        _
      %p691 = scmp.le.s32.totalorder 2, %s16
      // Predicated region
      $region53: #{tpu_custom_call.1} parent=5 // pred_check
        %p692 = pneg %p691
      $region54: #{tpu_custom_call.1} parent=5 // pred_check_branch
        %694 = sbr.rel (%p692) target = $region56
      $region55: #{tpu_custom_call.1} parent=5 // pred_region
        %s695 = ssub.s32 %s16, 2
        // Predicated region
        $region57: #{tpu_custom_call.1} parent=55 // pred_check
          %p696 = pneg %p160
        $region58: #{tpu_custom_call.1} parent=55 // pred_check_branch
          %698 = sbr.rel (%p696) target = $region60
        $region59: #{tpu_custom_call.1} parent=55 // pred_region
          %s699 = sand.u32 %s145, 1
          %s700 = scalar_lea.sflag [#allocation4], %s699
          %s701 = sand.u32 %s145, 1
          %s702 = smul.addr %s701, 2
          %s703 = scalar_lea.vmem [#allocation7], %s702
          %704 = dma.done %s700, 32
        $region60: #{tpu_custom_call.1} parent=55 // pred_fallthru
          _
      $region56: #{tpu_custom_call.1} parent=5 // pred_fallthru
        _
    $region6: #{tpu_custom_call.1} parent=1 // loop_footer
      %s20 = sadd.s32 1, %s16
    $region7: #{tpu_custom_call.1} parent=1 // loop_footer_branch
      %15 = sbr.rel target = $region3
    $region8: #{tpu_custom_call.1} parent=1 // loop_exit
      _
    %705 = vsyncpa [#allocation3], 1
    %s706 = scalar_lea.sflag [#allocation3], 1
    %707 = vsyncpa %s706, 1
    %708 = vsyncpa [#allocation6], 1
    %709 = vsyncpa [#allocation4], 1
    %s710 = scalar_lea.sflag [#allocation4], 1
    %711 = vsyncpa %s710, 1

</llo_original>
